<compile_context>
chip_gen: v7x
topology: tpu7x:2x2x1
jax: 0.10.0
libtpu: 0.0.40
codegen_flags: <defaults>
</compile_context>

<pallas_src>
import functools

import jax
import jax.numpy as jnp
from jax.experimental import pallas as pl
from jax.experimental.pallas import tpu as pltpu

IN_F = 20      # Linear in_features
OUT_F = 10     # Linear out_features
OUT_PAD = 128  # lane-dense padded output width (one full vreg lane extent)


def _linear_relu_kernel(x_ref, wt_ref, b_ref, o_ref):
    # x_ref:  (TB, IN_F)      -- batch tile
    # wt_ref: (IN_F, OUT_PAD) -- resident across the batch grid
    # b_ref:  (1, OUT_PAD)    -- resident across the batch grid
    # o_ref:  (TB, OUT_PAD)   -- lane-dense output slab (unmasked vst)
    acc = jnp.dot(x_ref[...], wt_ref[...], preferred_element_type=jnp.float32)
    acc = acc + b_ref[...]                       # bias broadcast over batch rows
    o_ref[...] = jnp.maximum(acc, 0.0).astype(o_ref.dtype)


def prepare_params(weight, bias):
    """Pad + transpose parameters once, outside the per-call hot path.

    weight: [OUT_F, IN_F] (PyTorch nn.Linear layout); bias: [OUT_F].
    Returns wt_padded [IN_F, OUT_PAD], b_padded [1, OUT_PAD] (zero padding).
    """
    wt_padded = jnp.zeros((IN_F, OUT_PAD), weight.dtype).at[:, :OUT_F].set(weight.T)
    b_padded = jnp.zeros((1, OUT_PAD), bias.dtype).at[0, :OUT_F].set(bias)
    return wt_padded, b_padded


@functools.partial(jax.jit, static_argnames=("block_b",))
def weight_method_forward(x, wt_padded, b_padded, *, block_b=1024):
    """x: [B, IN_F] f32; wt_padded: [IN_F, OUT_PAD]; b_padded: [1, OUT_PAD]."""
    B, in_f = x.shape
    out_pad = wt_padded.shape[1]

    # Batch tile: full B for small batches (block shape == array dim is legal),
    # otherwise a large multiple-of-8 tile so the grid pipelines x/o DMAs
    # against compute and amortizes per-step overhead.
    tb = B if B <= block_b else block_b
    grid = (pl.cdiv(B, tb),)

    flops = 2 * B * in_f * out_pad
    bytes_accessed = (x.size + wt_padded.size + b_padded.size + B * out_pad) * 4

    y_padded = pl.pallas_call(
        _linear_relu_kernel,
        out_shape=jax.ShapeDtypeStruct((B, out_pad), x.dtype),
        grid_spec=pltpu.PrefetchScalarGridSpec(
            num_scalar_prefetch=0,
            grid=grid,
            in_specs=[
                pl.BlockSpec((tb, in_f), lambda i: (i, 0)),        # x: tiled over batch
                pl.BlockSpec((in_f, out_pad), lambda i: (0, 0)),   # weight: resident
                pl.BlockSpec((1, out_pad), lambda i: (0, 0)),      # bias:   resident
            ],
            out_specs=pl.BlockSpec((tb, out_pad), lambda i: (i, 0)),
        ),
        compiler_params=pltpu.CompilerParams(
            dimension_semantics=("parallel",),          # batch axis shards across TCs
            vmem_limit_bytes=32 * 1024 * 1024,          # safe on v7x's 64 MiB VMEM
        ),
        cost_estimate=pl.CostEstimate(
            flops=flops, transcendentals=0, bytes_accessed=bytes_accessed),
    )(x, wt_padded, b_padded)

    # Under jit this slice fuses with downstream consumers (single copy).
    return y_padded[:, :OUT_F]


if __name__ == "__main__":
    key = jax.random.PRNGKey(0)
    kx, kw, kb, kx2 = jax.random.split(key, 4)

    B = 8
    x = jax.random.normal(kx, (B, IN_F), dtype=jnp.float32)
    # Deterministic init mimicking torch.nn.Linear default (uniform +/- 1/sqrt(in)).
    bound = 1.0 / jnp.sqrt(jnp.float32(IN_F))
    weight = jax.random.uniform(kw, (OUT_F, IN_F), minval=-bound, maxval=bound,
                                dtype=jnp.float32)
    bias = jax.random.uniform(kb, (OUT_F,), minval=-bound, maxval=bound,
                              dtype=jnp.float32)

    wt_padded, b_padded = prepare_params(weight, bias)

    # Small-shape forward (single grid step, block == full batch).
    y = weight_method_forward(x, wt_padded, b_padded)
    jax.block_until_ready(y)
    y_ref = jnp.maximum(x @ weight.T + bias, 0.0)
    assert y.shape == (B, OUT_F)
    assert jnp.allclose(y, y_ref, atol=1e-5), "mismatch vs reference (B=8)"

    # Exercise the batch-tiled, multi-step pipelined path as well.
    B2 = 256
    x2 = jax.random.normal(kx2, (B2, IN_F), dtype=jnp.float32)
    y2 = weight_method_forward(x2, wt_padded, b_padded, block_b=64)  # grid=(4,)
    jax.block_until_ready(y2)
    y2_ref = jnp.maximum(x2 @ weight.T + bias, 0.0)
    assert y2.shape == (B2, OUT_F)
    assert jnp.allclose(y2, y2_ref, atol=1e-5), "mismatch vs reference (B=256, tiled)"

    print("KERNEL_OK")
</pallas_src>

<mosaic_0001>
module attributes {stable_mosaic.version = 11 : i64} {
  func.func @_linear_relu_kernel(%arg0: i32, %arg1: memref<8x20xf32, #tpu.memory_space<vmem>>, %arg2: memref<20x128xf32, #tpu.memory_space<vmem>>, %arg3: memref<1x128xf32, #tpu.memory_space<vmem>>, %arg4: memref<8x128xf32, #tpu.memory_space<vmem>>) attributes {dimension_semantics = [#tpu.dimension_semantics<parallel>], iteration_bounds = array<i64: 1>, scalar_prefetch = 0 : i64, scratch_operands = 0 : i64, tpu.core_type = #tpu.core_type<tc>, window_params = [{transform_indices = @transform_0, window_bounds = array<i64: 8, 20>}, {pipeline_mode = #tpu.pipeline_mode<synchronous>, transform_indices = @transform_1, window_bounds = array<i64: 20, 128>}, {pipeline_mode = #tpu.pipeline_mode<synchronous>, transform_indices = @transform_2, window_bounds = array<i64: 1, 128>}, {transform_indices = @transform_3, window_bounds = array<i64: 8, 128>}]} {
    %c0 = arith.constant 0 : index
    %c0_0 = arith.constant 0 : index
    %0 = vector.load %arg1[%c0, %c0_0] : memref<8x20xf32, #tpu.memory_space<vmem>>, vector<8x20xf32>
    %c0_1 = arith.constant 0 : index
    %c0_2 = arith.constant 0 : index
    %1 = vector.load %arg2[%c0_1, %c0_2] : memref<20x128xf32, #tpu.memory_space<vmem>>, vector<20x128xf32>
    %cst = arith.constant dense<0.000000e+00> : vector<8x128xf32>
    %2 = tpu.matmul %0, %1, %cst {dimension_numbers = #tpu.dot_dimension_numbers<[1], [0], [0], [1], [0, 0, 1, 1], [], []>} : vector<8x20xf32>, vector<20x128xf32>, vector<8x128xf32> -> vector<8x128xf32>
    %c0_3 = arith.constant 0 : index
    %c0_4 = arith.constant 0 : index
    %3 = vector.load %arg3[%c0_3, %c0_4] : memref<1x128xf32, #tpu.memory_space<vmem>>, vector<1x128xf32>
    %4 = vector.broadcast %3 : vector<1x128xf32> to vector<8x128xf32>
    %5 = arith.addf %2, %4 : vector<8x128xf32>
    %cst_5 = arith.constant 0.000000e+00 : f32
    %6 = vector.broadcast %cst_5 : f32 to vector<8x128xf32>
    %7 = arith.maximumf %5, %6 : vector<8x128xf32>
    %c0_6 = arith.constant 0 : index
    %c0_7 = arith.constant 0 : index
    %8 = vector.load %arg4[%c0_6, %c0_7] : memref<8x128xf32, #tpu.memory_space<vmem>>, vector<8x128xf32>
    tpu.vector_store %arg4[%c0_6, %c0_7], %7 {strides = array<i32>} : memref<8x128xf32, #tpu.memory_space<vmem>>, vector<8x128xf32>,
    return
  }
  func.func @transform_0(%arg0: i32) -> (i32, i32) {
    %c0_i32 = arith.constant 0 : i32
    %c0_i32_0 = arith.constant 0 : i32
    return %arg0, %c0_i32 : i32, i32
  }
  func.func @transform_1(%arg0: i32) -> (i32, i32) {
    %c0_i32 = arith.constant 0 : i32
    %c0_i32_0 = arith.constant 0 : i32
    %c0_i32_1 = arith.constant 0 : i32
    return %c0_i32, %c0_i32_0 : i32, i32
  }
  func.func @transform_2(%arg0: i32) -> (i32, i32) {
    %c0_i32 = arith.constant 0 : i32
    %c0_i32_0 = arith.constant 0 : i32
    %c0_i32_1 = arith.constant 0 : i32
    return %c0_i32, %c0_i32_0 : i32, i32
  }
  func.func @transform_3(%arg0: i32) -> (i32, i32) {
    %c0_i32 = arith.constant 0 : i32
    %c0_i32_0 = arith.constant 0 : i32
    return %arg0, %c0_i32 : i32, i32
  }
}

</mosaic_0001>

<llo_original>
// kernel: weight_method_forward.1
$region0: #{weight_method_forward.1}
  #allocation0 [shape = 'u32[]', space=smem, size = 0x4, offset = 0x4, fixed_abs, tag = 'smem constant byte address 0x4 - core index']
  #allocation1 [shape = 'u32[144,128]{1,0:T(1,128)}', space=vmem, size = 0x12000, scoped, tag = 'internal scratch']
  %s0 = inlined_call_operand.hbm [shape: f32[8,20], index: 0, kind: input, shape index: {}]
  %s1 = inlined_call_operand.hbm [shape: f32[20,128], index: 1, kind: input, shape index: {}]
  %s2 = inlined_call_operand.vmem [shape: f32[1,128], index: 2, kind: input, shape index: {}]
  %s3 = inlined_call_operand.hbm [shape: f32[8,128], index: 3, kind: output, shape index: {}]
  %s4 = sld [smem:[#allocation0]]
  $region30: #{weight_method_forward.1} parent=0
    _
  %s6 = ssub.s32 1, %s4
  %s7 = scalar_select 0, %s6, %s4
  $region1: #{weight_method_forward.1} parent=0
    #allocation2 [shape = 'u8[4096]{0}', space=vmem, size = 0x1000, scoped, tag = 'input window, operand 0, single buffered']
    #allocation3 [shape = 's32[1]{0}', space=sflag, size = 0x4, scoped, tag = 'scoped memory for weight_method_forward.1']
    #allocation4 [shape = 's32[1]{0}', space=sflag, size = 0x4, scoped, tag = 'scoped memory for weight_method_forward.1']
    #allocation5 [shape = 'u8[12288]{0}', space=vmem, size = 0x3000, scoped, tag = 'input window, operand 1, single buffered']
    #allocation6 [shape = 's32[1]{0}', space=sflag, size = 0x4, scoped, tag = 'scoped memory for weight_method_forward.1']
    #allocation7 [shape = 'u8[4096]{0}', space=vmem, size = 0x1000, scoped, tag = 'output window, operand 0, single buffered']
    %8 = vsyncpa [#allocation3], 0
    %9 = vsyncpa [#allocation6], 0
    %10 = vsyncpa [#allocation4], 0
    // Predicated region
    $region2: #{weight_method_forward.1} parent=1 // pred_check
      _
    $region3: #{weight_method_forward.1} parent=1 // pred_check_branch
      %12 = sbr.rel (0) target = $region5
    $region4: #{weight_method_forward.1} parent=1 // pred_region
      %s14 = ssub.s32 128, 128
      %15 = vsyncadd [#allocation3], %s14
      %s17 = sshll.u32 [#allocation2], 4
      %s18 = int_to_ptr.vmem [resolvable:$true] %s17
      %20 = dma.hbm_to_vmem [thread:$0]  %s0, 128, %s18, [#allocation3]
    $region5: #{weight_method_forward.1} parent=1 // pred_fallthru
      _
    // Predicated region
    $region6: #{weight_method_forward.1} parent=1 // pred_check
      _
    $region7: #{weight_method_forward.1} parent=1 // pred_check_branch
      %22 = sbr.rel (0) target = $region9
    $region8: #{weight_method_forward.1} parent=1 // pred_region
      %s24 = ssub.s32 384, 384
      %25 = vsyncadd [#allocation6], %s24
      %s26 = sshll.u32 [#allocation5], 4
      %s27 = int_to_ptr.vmem [resolvable:$true] %s26
      %32 = dma.hbm_to_vmem [thread:$0]  %s1, 384, %s27, [#allocation6], 128, 128, 8
    $region9: #{weight_method_forward.1} parent=1 // pred_fallthru
      _
    // Predicated region
    $region10: #{weight_method_forward.1} parent=1 // pred_check
      _
    $region11: #{weight_method_forward.1} parent=1 // pred_check_branch
      %34 = sbr.rel (0) target = $region13
    $region12: #{weight_method_forward.1} parent=1 // pred_region
      _
    $region13: #{weight_method_forward.1} parent=1 // pred_fallthru
      _
    // Predicated region
    $region14: #{weight_method_forward.1} parent=1 // pred_check
      _
    $region15: #{weight_method_forward.1} parent=1 // pred_check_branch
      %36 = sbr.rel (0) target = $region17
    $region16: #{weight_method_forward.1} parent=1 // pred_region
      %37 = dma.done [#allocation3], 128
    $region17: #{weight_method_forward.1} parent=1 // pred_fallthru
      _
    // Predicated region
    $region18: #{weight_method_forward.1} parent=1 // pred_check
      _
    $region19: #{weight_method_forward.1} parent=1 // pred_check_branch
      %39 = sbr.rel (0) target = $region21
    $region20: #{weight_method_forward.1} parent=1 // pred_region
      %40 = dma.done [#allocation6], 384
    $region21: #{weight_method_forward.1} parent=1 // pred_fallthru
      _
    %v41 = vld [vmem:[#allocation2] sm:$0xff]
    %v42 = vld [vmem:[#allocation5] sm:$0xff]
    %v43 = vld [vmem:[#allocation5 + $0x8] sm:$0xff]
    %v44 = vld [vmem:[#allocation5 + $0x10] sm:$0xf]
    %v45 = vld [vmem:[%s2] sm:$0x1]
    %v47 = vlaneseq
    %v48 = vshrl.u32 %v47, 7
    %v49 = vsub.s32 0, %v48
    %v50 = vrot.slane %v45, %v49
    %vm52 = vcmask 162816
    %v54 = vsel %vm52, %v41, 0
    %vm56 = vcmask 1043456
    %v58 = vsel %vm56, %v44, 0
    %60 = vmatprep.subr.mxu0 0.0
    %61 = vmatpush1.msra.mxu0 %v42
    %62 = vmatprep.subr.mxu0 0.0
    %63 = vmatpush1.msra.mxu0 %v43
    %64 = vmatprep.subr.mxu0 0.0
    %65 = vmatpush1.msra.mxu0 %v58
    %66 = vmatprep.subr.mxu0 0.0
    %67 = vmatpush1.msra.mxu0 0.0
    %68 = vmatprep.subr.mxu0 0.0
    %69 = vmatpush1.msra.mxu0 0.0
    %70 = vmatprep.subr.mxu0 0.0
    %71 = vmatpush1.msra.mxu0 0.0
    %72 = vmatprep.subr.mxu0 0.0
    %73 = vmatpush1.msra.mxu0 0.0
    %74 = vmatprep.subr.mxu0 0.0
    %75 = vmatpush1.msra.mxu0 0.0
    %76 = vmatprep.subr.mxu0 0.0
    %77 = vmatpush1.msra.mxu0 0.0
    %78 = vmatprep.subr.mxu0 0.0
    %79 = vmatpush1.msra.mxu0 0.0
    %80 = vmatprep.subr.mxu0 0.0
    %81 = vmatpush1.msra.mxu0 0.0
    %82 = vmatprep.subr.mxu0 0.0
    %83 = vmatpush1.msra.mxu0 0.0
    %84 = vmatprep.subr.mxu0 0.0
    %85 = vmatpush1.msra.mxu0 0.0
    %86 = vmatprep.subr.mxu0 0.0
    %87 = vmatpush1.msra.mxu0 0.0
    %88 = vmatprep.subr.mxu0 0.0
    %89 = vmatpush1.msra.mxu0 0.0
    %90 = vmatprep.subr.mxu0 0.0
    %91 = vmatpush1.msra.mxu0 0.0
    %92 = vmatprep.subr.mxu0 0.0
    %93 = vmatpush1.msra.mxu0 0.0
    %94 = vmatprep.subr.mxu0 0.0
    %95 = vmatpush1.msra.mxu0 0.0
    %96 = vmatprep.subr.mxu0 0.0
    %97 = vmatpush1.msra.mxu0 0.0
    %98 = vmatprep.subr.mxu0 0.0
    %99 = vmatpush1.msra.mxu0 0.0
    %100 = vmatprep.subr.mxu0 0.0
    %101 = vmatpush1.msra.mxu0 0.0
    %102 = vmatprep.subr.mxu0 0.0
    %103 = vmatpush1.msra.mxu0 0.0
    %104 = vmatprep.subr.mxu0 0.0
    %105 = vmatpush1.msra.mxu0 0.0
    %106 = vmatprep.subr.mxu0 0.0
    %107 = vmatpush1.msra.mxu0 0.0
    %108 = vmatprep.subr.mxu0 0.0
    %109 = vmatpush1.msra.mxu0 0.0
    %110 = vmatprep.subr.mxu0 0.0
    %111 = vmatpush1.msra.mxu0 0.0
    %112 = vmatprep.subr.mxu0 0.0
    %113 = vmatpush1.msra.mxu0 0.0
    %114 = vmatprep.subr.mxu0 0.0
    %115 = vmatpush1.msra.mxu0 0.0
    %116 = vmatprep.subr.mxu0 0.0
    %117 = vmatpush1.msra.mxu0 0.0
    %118 = vmatprep.subr.mxu0 0.0
    %119 = vmatpush1.msra.mxu0 0.0
    %120 = vmatprep.subr.mxu0 0.0
    %121 = vmatpush1.msra.mxu0 0.0
    %122 = vmatprep.subr.mxu0 0.0
    %123 = vmatpush1.msra.mxu0 0.0
    %124 = vmatprep.mubr.f32.mxu0 0.0
    %125 = vmatmul.mubr.f32.gmra.mrb[0].mxu0 %v54
    %v126 = vpop.f32.mrb[0].mxu0
    %v127 = vadd.f32 %v50, %v126
    %v128 = vpop.f32.mrb[0].mxu0
    %129 = vdwg.mxu0
    %v130 = vmax.f32 %v127, 0.0
    %131 = vst [vmem:[#allocation7] sm:$0xff] %v130
    // Predicated region
    $region22: #{weight_method_forward.1} parent=1 // pred_check
      _
    $region23: #{weight_method_forward.1} parent=1 // pred_check_branch
      %133 = sbr.rel (0) target = $region25
    $region24: #{weight_method_forward.1} parent=1 // pred_region
      %s135 = ssub.s32 128, 128
      %136 = vsyncadd [#allocation4], %s135
      %s138 = sshll.u32 [#allocation7], 4
      %s139 = int_to_ptr.vmem [resolvable:$true] %s138
      %141 = dma.vmem_to_hbm [thread:$0]  %s139, 128, %s3, [#allocation4]
    $region25: #{weight_method_forward.1} parent=1 // pred_fallthru
      _
    // Predicated region
    $region26: #{weight_method_forward.1} parent=1 // pred_check
      _
    $region27: #{weight_method_forward.1} parent=1 // pred_check_branch
      %143 = sbr.rel (0) target = $region29
    $region28: #{weight_method_forward.1} parent=1 // pred_region
      %144 = dma.done [#allocation4], 128
    $region29: #{weight_method_forward.1} parent=1 // pred_fallthru
      _
    %145 = vsyncpa [#allocation3], 1
    %146 = vsyncpa [#allocation6], 1
    %147 = vsyncpa [#allocation4], 1

</llo_original>
